<compile_context>
chip_gen: v7x
topology: tpu7x:2x2x1
jax: 0.10.0
libtpu: 0.0.40
codegen_flags: <defaults>
</compile_context>

<pallas_src>
import functools

import jax
import jax.numpy as jnp
from jax.experimental import pallas as pl
from jax.experimental.pallas import tpu as pltpu

LANES = 128
# (2048, 128) f32 tile = 1 MiB; double-buffered x (f32) + targets (int8)
# = 2 * (1 MiB + 256 KiB) = 2.5 MiB VMEM, far under the 32 MiB scoped default.
MAX_TILE_M = 2048
MIN_TILE_M = 32          # int8 targets: sublane tile is (32, 128)


def _focal_loss_kernel(x_ref, t_ref, out_ref, acc_ref, *,
                       alpha, gamma, tile_m, full_rows, rem,
                       binary_targets, need_mask):
    j = pl.program_id(0)              # megacore partition ("parallel")
    i = pl.program_id(1)              # reduction step ("arbitrary")
    steps = pl.num_programs(1)

    @pl.when(i == 0)
    def _():
        acc_ref[...] = jnp.zeros_like(acc_ref)

    x = x_ref[...].astype(jnp.float32)
    t = t_ref[...].astype(jnp.float32)
    omt = 1.0 - t

    # Numerically-stable BCE-with-logits: max(x,0) - x*t + log1p(exp(-|x|))
    e = jnp.exp(-jnp.abs(x))
    bce = jnp.maximum(x, 0.0) - x * t + jnp.log1p(e)

    if binary_targets:
        # For t in {0,1}: exp(-bce) == sigmoid(x) when t==1 and 1-sigmoid(x)
        # when t==0, so pt can be formed from the exp(-|x|) we already have —
        # saves the third transcendental per element.
        # (pl.reciprocal(..., approx=True) would shave a bit more EUP time at
        #  ~1e-3 relative accuracy cost; kept exact here.)
        r = 1.0 / (1.0 + e)
        p = jnp.where(x >= 0.0, r, e * r)          # sigmoid(x)
        pt = t * p + omt * (1.0 - p)
    else:
        pt = jnp.exp(-bce)                         # exact original semantics

    om = 1.0 - pt
    g_int = int(gamma)
    if float(gamma) == float(g_int) and g_int >= 0:
        # Integer gamma -> repeated multiplication (avoids pow = log+exp on EUP).
        if g_int == 0:
            focal = jnp.ones_like(om)
        else:
            focal = om
            for _ in range(g_int - 1):
                focal = focal * om
    else:
        focal = om ** gamma

    alpha_t = alpha * t + (1.0 - alpha) * omt
    loss = alpha_t * focal * bce

    def _accumulate(vals):
        # Fold the (tile_m, 128) tile onto the (8, 128) accumulator — pure VPU
        # adds, no cross-lane work on the per-step critical path.
        acc_ref[...] += vals.reshape(tile_m // 8, 8, LANES).sum(axis=0)

    if need_mask:
        # Only block(s) that can touch the ragged tail (or a fully out-of-range
        # duplicate block) pay for the mask; interior blocks take the unmasked
        # branch. Row/lane comparison (not a flat 32-bit index), so no overflow.
        base_row = (j * steps + i) * tile_m
        has_tail = base_row + tile_m > full_rows

        @pl.when(has_tail)
        def _():
            row = base_row + jax.lax.broadcasted_iota(jnp.int32, (tile_m, LANES), 0)
            lane = jax.lax.broadcasted_iota(jnp.int32, (tile_m, LANES), 1)
            valid = row < full_rows
            if rem:
                valid = valid | ((row == full_rows) & (lane < rem))
            _accumulate(jnp.where(valid, loss, 0.0))

        @pl.when(jnp.logical_not(has_tail))
        def _():
            _accumulate(loss)
    else:
        _accumulate(loss)

    @pl.when(i == steps - 1)
    def _():
        # Single sublane reduction per partition; lanes summed in the wrapper.
        out_ref[...] = jnp.sum(acc_ref[...], axis=0, keepdims=True)


def focal_loss(inputs, targets, alpha=0.25, gamma=2.0, reduction="mean"):
    """inputs: (N, 1, H, W) logits; targets: (N, H, W). Scalar for mean/sum."""
    # torch: targets.unsqueeze(1).float()  (the float cast happens in-kernel)
    t = jnp.expand_dims(targets, 1)
    if t.shape != inputs.shape:
        # Only materializes if inputs ever had C > 1 (not this module's intended
        # (N,1,H,W) shape); guarded so the common case stays a free reshape.
        t = jnp.broadcast_to(t, inputs.shape)
    x = inputs

    if reduction not in ("mean", "sum"):
        # TODO(synk): 'none' reduction (elementwise output) served by plain JAX;
        # the Pallas kernel below covers only the reduced (mean/sum) hot path.
        xf = x.astype(jnp.float32)
        tf = t.astype(jnp.float32)
        bce = jnp.maximum(xf, 0.0) - xf * tf + jnp.log1p(jnp.exp(-jnp.abs(xf)))
        pt = jnp.exp(-bce)
        return (alpha * tf + (1 - alpha) * (1 - tf)) * (1 - pt) ** gamma * bce

    # Boolean targets (the typical mask case) stream as int8 — 1 B/elem of HBM
    # instead of 4 — and unlock the sigmoid-based pt (one fewer transcendental).
    # Non-bool targets (possibly soft labels) use the exact exp(-bce) path.
    binary_targets = targets.dtype == jnp.bool_
    t_stream = t.astype(jnp.int8) if binary_targets else t

    n_elem = int(x.size)
    full_rows, rem = divmod(n_elem, LANES)
    rows = full_rows + (1 if rem else 0)

    x_flat = x.reshape(-1)
    t_flat = t_stream.reshape(-1)
    if rem:
        # Only lane-ragged inputs (n_elem % 128 != 0) pad, and only by < 128
        # elements; chunk alignment is handled by partial blocks + the mask.
        x_flat = jnp.pad(x_flat, (0, LANES - rem))
        t_flat = jnp.pad(t_flat, (0, LANES - rem))
    x2 = x_flat.reshape(rows, LANES)
    t2 = t_flat.reshape(rows, LANES)

    # Megacore split is independent of tile size: any input with >= 64 rows
    # (two 32-row min tiles) gets a 2-way "parallel" leading axis so v7x's two
    # TensorCores share the work; harmless sequential loop on v5e/v6e.
    num_parts = 2 if rows >= 2 * MIN_TILE_M else 1
    rows_per_part = -(-rows // num_parts)
    tile_m = min(MAX_TILE_M,
                 ((rows_per_part + MIN_TILE_M - 1) // MIN_TILE_M) * MIN_TILE_M)
    nblk = -(-rows // tile_m)                 # row-blocks actually backed by data
    steps = -(-nblk // num_parts)             # reduction steps per partition
    # If num_parts * steps > nblk, the trailing step is clamped onto the last
    # real block by the index_map and contributes zero via the in-kernel mask.
    need_mask = (num_parts * steps * tile_m * LANES) != n_elem

    def block_map(jj, ii):
        return (jnp.minimum(jj * steps + ii, nblk - 1), 0)

    kernel = functools.partial(
        _focal_loss_kernel, alpha=float(alpha), gamma=float(gamma),
        tile_m=int(tile_m), full_rows=int(full_rows), rem=int(rem),
        binary_targets=bool(binary_targets), need_mask=bool(need_mask))

    partials = pl.pallas_call(
        kernel,
        out_shape=jax.ShapeDtypeStruct((num_parts, LANES), jnp.float32),
        grid_spec=pltpu.PrefetchScalarGridSpec(
            num_scalar_prefetch=0,
            grid=(num_parts, steps),
            in_specs=[
                pl.BlockSpec((tile_m, LANES), block_map),
                pl.BlockSpec((tile_m, LANES), block_map),
            ],
            out_specs=pl.BlockSpec((1, LANES), lambda jj, ii: (jj, 0)),
            scratch_shapes=[pltpu.VMEM((8, LANES), jnp.float32)],
        ),
        compiler_params=pltpu.CompilerParams(
            dimension_semantics=("parallel", "arbitrary")),
    )(x2, t2)

    total = jnp.sum(partials)
    if reduction == "mean":
        return total / jnp.float32(n_elem)
    return total


def _reference(inputs, targets, alpha=0.25, gamma=2.0, reduction="mean"):
    t = jnp.expand_dims(targets, 1).astype(jnp.float32)
    t = jnp.broadcast_to(t, inputs.shape)
    x = inputs.astype(jnp.float32)
    bce = jnp.maximum(x, 0.0) - x * t + jnp.log1p(jnp.exp(-jnp.abs(x)))
    pt = jnp.exp(-bce)
    loss = (alpha * t + (1 - alpha) * (1 - t)) * (1 - pt) ** gamma * bce
    if reduction == "mean":
        return loss.mean()
    return loss.sum()


if __name__ == "__main__":
    key = jax.random.PRNGKey(0)
    k1, k2, k3, k4, k5, k6 = jax.random.split(key, 6)

    # Small shape consistent with the module: inputs (N,1,H,W), targets (N,H,W).
    N, C, H, W = 2, 1, 16, 16
    inputs = jax.random.normal(k1, (N, C, H, W), dtype=jnp.float32)
    targets = jax.random.uniform(k2, (N, H, W)) > 0.5          # bool mask
    out = jax.block_until_ready(focal_loss(inputs, targets, alpha=0.25, gamma=2))
    ref = _reference(inputs, targets)
    assert jnp.allclose(out, ref, rtol=1e-5, atol=1e-6), (out, ref)

    # Moderate shape: multi-block grid + megacore partitioning, no padding/mask.
    inputs2 = jax.random.normal(k3, (2, 1, 512, 512), dtype=jnp.float32)
    targets2 = jax.random.uniform(k4, (2, 512, 512)) > 0.5
    out2 = jax.block_until_ready(
        focal_loss(inputs2, targets2, alpha=0.25, gamma=2, reduction="sum"))
    ref2 = _reference(inputs2, targets2, reduction="sum")
    assert jnp.allclose(out2, ref2, rtol=1e-4, atol=1e-2), (out2, ref2)

    # Ragged shape: lane padding + partial last block + in-kernel mask path.
    inputs3 = jax.random.normal(k5, (3, 1, 100, 77), dtype=jnp.float32)
    targets3 = jax.random.uniform(k6, (3, 100, 77)) > 0.5
    out3 = jax.block_until_ready(focal_loss(inputs3, targets3, alpha=0.25, gamma=2))
    ref3 = _reference(inputs3, targets3)
    assert jnp.allclose(out3, ref3, rtol=1e-5, atol=1e-6), (out3, ref3)

    # Odd block count: exercises the clamped/duplicated trailing block path.
    inputs4 = jax.random.normal(k1, (1, 1, 625, 1024), dtype=jnp.float32)
    targets4 = jax.random.uniform(k2, (1, 625, 1024)) > 0.5
    out4 = jax.block_until_ready(
        focal_loss(inputs4, targets4, alpha=0.25, gamma=2, reduction="sum"))
    ref4 = _reference(inputs4, targets4, reduction="sum")
    assert jnp.allclose(out4, ref4, rtol=1e-4, atol=1e-2), (out4, ref4)

    # Float (soft) targets exercise the exact exp(-bce) general path.
    targets5 = jax.random.uniform(k2, (N, H, W), dtype=jnp.float32)
    out5 = jax.block_until_ready(focal_loss(inputs, targets5, alpha=0.25, gamma=2))
    ref5 = _reference(inputs, targets5)
    assert jnp.allclose(out5, ref5, rtol=1e-5, atol=1e-6), (out5, ref5)

    print("KERNEL_OK")
</pallas_src>

<mosaic_0001>
module attributes {stable_mosaic.version = 11 : i64} {
  func.func @_focal_loss_kernel(%arg0: i32, %arg1: i32, %arg2: memref<32x128xf32, #tpu.memory_space<vmem>>, %arg3: memref<32x128xi8, #tpu.memory_space<vmem>>, %arg4: memref<1x128xf32, #tpu.memory_space<vmem>>, %arg5: memref<8x128xf32, #tpu.memory_space<vmem>>) attributes {dimension_semantics = [#tpu.dimension_semantics<parallel>, #tpu.dimension_semantics<arbitrary>], iteration_bounds = array<i64: 1, 1>, scalar_prefetch = 0 : i64, scratch_operands = 1 : i64, tpu.core_type = #tpu.core_type<tc>, window_params = [{transform_indices = @transform_0, window_bounds = array<i64: 32, 128>}, {transform_indices = @transform_1, window_bounds = array<i64: 32, 128>}, {transform_indices = @transform_2, window_bounds = array<i64: 1, 128>}]} {
    %c0_i32 = arith.constant 0 : i32
    %0 = arith.cmpi eq, %arg1, %c0_i32 : i32
    %1 = arith.extui %0 : i1 to i32
    %c0_i32_0 = arith.constant 0 : i32
    %2 = arith.cmpi ne, %1, %c0_i32_0 : i32
    scf.if %2 {
      %cst_18 = arith.constant 0.000000e+00 : f32
      %54 = vector.broadcast %cst_18 : f32 to vector<8x128xf32>
      %c0_19 = arith.constant 0 : index
      %c0_20 = arith.constant 0 : index
      %55 = vector.load %arg5[%c0_19, %c0_20] : memref<8x128xf32, #tpu.memory_space<vmem>>, vector<8x128xf32>
      tpu.vector_store %arg5[%c0_19, %c0_20], %54 {strides = array<i32>} : memref<8x128xf32, #tpu.memory_space<vmem>>, vector<8x128xf32>,
    } else {
    }
    %c0 = arith.constant 0 : index
    %c0_1 = arith.constant 0 : index
    %3 = vector.load %arg2[%c0, %c0_1] : memref<32x128xf32, #tpu.memory_space<vmem>>, vector<32x128xf32>
    %c0_2 = arith.constant 0 : index
    %c0_3 = arith.constant 0 : index
    %4 = vector.load %arg3[%c0_2, %c0_3] : memref<32x128xi8, #tpu.memory_space<vmem>>, vector<32x128xi8>
    %5 = arith.sitofp %4 : vector<32x128xi8> to vector<32x128xf32>
    %cst = arith.constant 1.000000e+00 : f32
    %6 = vector.broadcast %cst : f32 to vector<32x128xf32>
    %7 = arith.subf %6, %5 : vector<32x128xf32>
    %8 = math.absf %3 : vector<32x128xf32>
    %cst_4 = arith.constant 0.000000e+00 : f32
    %9 = vector.broadcast %cst_4 : f32 to vector<32x128xf32>
    %10 = arith.subf %9, %8 : vector<32x128xf32>
    %11 = math.exp %10 : vector<32x128xf32>
    %cst_5 = arith.constant 0.000000e+00 : f32
    %12 = vector.broadcast %cst_5 : f32 to vector<32x128xf32>
    %13 = arith.maximumf %3, %12 : vector<32x128xf32>
    %14 = arith.mulf %3, %5 : vector<32x128xf32>
    %15 = arith.subf %13, %14 : vector<32x128xf32>
    %16 = math.log1p %11 : vector<32x128xf32>
    %17 = arith.addf %15, %16 : vector<32x128xf32>
    %cst_6 = arith.constant 1.000000e+00 : f32
    %18 = vector.broadcast %cst_6 : f32 to vector<32x128xf32>
    %19 = arith.addf %18, %11 : vector<32x128xf32>
    %cst_7 = arith.constant 1.000000e+00 : f32
    %20 = vector.broadcast %cst_7 : f32 to vector<32x128xf32>
    %21 = arith.divf %20, %19 : vector<32x128xf32>
    %cst_8 = arith.constant 0.000000e+00 : f32
    %22 = vector.broadcast %cst_8 : f32 to vector<32x128xf32>
    %23 = arith.cmpf oge, %3, %22 : vector<32x128xf32>
    %24 = arith.mulf %11, %21 : vector<32x128xf32>
    %25 = arith.select %23, %21, %24 : vector<32x128xi1>, vector<32x128xf32>
    %26 = arith.mulf %5, %25 : vector<32x128xf32>
    %cst_9 = arith.constant 1.000000e+00 : f32
    %27 = vector.broadcast %cst_9 : f32 to vector<32x128xf32>
    %28 = arith.subf %27, %25 : vector<32x128xf32>
    %29 = arith.mulf %7, %28 : vector<32x128xf32>
    %30 = arith.addf %26, %29 : vector<32x128xf32>
    %cst_10 = arith.constant 1.000000e+00 : f32
    %31 = vector.broadcast %cst_10 : f32 to vector<32x128xf32>
    %32 = arith.subf %31, %30 : vector<32x128xf32>
    %33 = arith.mulf %32, %32 : vector<32x128xf32>
    %cst_11 = arith.constant 2.500000e-01 : f32
    %34 = vector.broadcast %cst_11 : f32 to vector<32x128xf32>
    %35 = arith.mulf %34, %5 : vector<32x128xf32>
    %cst_12 = arith.constant 7.500000e-01 : f32
    %36 = vector.broadcast %cst_12 : f32 to vector<32x128xf32>
    %37 = arith.mulf %36, %7 : vector<32x128xf32>
    %38 = arith.addf %35, %37 : vector<32x128xf32>
    %39 = arith.mulf %38, %33 : vector<32x128xf32>
    %40 = arith.mulf %39, %17 : vector<32x128xf32>
    %c1_i32 = arith.constant 1 : i32
    %41 = arith.muli %arg0, %c1_i32 : i32
    %42 = arith.addi %41, %arg1 : i32
    %c32_i32 = arith.constant 32 : i32
    %43 = arith.muli %42, %c32_i32 : i32
    %c32_i32_13 = arith.constant 32 : i32
    %44 = arith.addi %43, %c32_i32_13 : i32
    %c4_i32 = arith.constant 4 : i32
    %45 = arith.cmpi sgt, %44, %c4_i32 : i32
    %46 = arith.extui %45 : i1 to i32
    %c0_i32_14 = arith.constant 0 : i32
    %47 = arith.cmpi ne, %46, %c0_i32_14 : i32
    scf.if %47 {
      %54 = tpu.iota {dimensions = array<i32: 0>} : vector<32x128xi32>
      %55 = vector.broadcast %43 : i32 to vector<32x128xi32>
      %56 = arith.addi %55, %54 : vector<32x128xi32>
      %c4_i32_18 = arith.constant 4 : i32
      %57 = vector.broadcast %c4_i32_18 : i32 to vector<32x128xi32>
      %58 = arith.cmpi slt, %56, %57 : vector<32x128xi32>
      %cst_19 = arith.constant 0.000000e+00 : f32
      %59 = vector.broadcast %cst_19 : f32 to vector<32x128xf32>
      %60 = arith.select %58, %40, %59 : vector<32x128xi1>, vector<32x128xf32>
      %c0_20 = arith.constant 0 : index
      %c0_21 = arith.constant 0 : index
      %61 = vector.load %arg5[%c0_20, %c0_21] : memref<8x128xf32, #tpu.memory_space<vmem>>, vector<8x128xf32>
      %62 = vector.shape_cast %60 : vector<32x128xf32> to vector<4x8x128xf32>
      %cst_22 = arith.constant dense<0.000000e+00> : vector<8x128xf32>
      %63 = vector.multi_reduction <add>, %62, %cst_22 [0] : vector<4x8x128xf32> to vector<8x128xf32>
      %64 = arith.addf %61, %63 : vector<8x128xf32>
      %c0_23 = arith.constant 0 : index
      %c0_24 = arith.constant 0 : index
      %65 = vector.load %arg5[%c0_23, %c0_24] : memref<8x128xf32, #tpu.memory_space<vmem>>, vector<8x128xf32>
      tpu.vector_store %arg5[%c0_23, %c0_24], %64 {strides = array<i32>} : memref<8x128xf32, #tpu.memory_space<vmem>>, vector<8x128xf32>,
    } else {
    }
    %true = arith.constant true
    %48 = arith.xori %45, %true : i1
    %49 = arith.extui %48 : i1 to i32
    %c0_i32_15 = arith.constant 0 : i32
    %50 = arith.cmpi ne, %49, %c0_i32_15 : i32
    scf.if %50 {
      %c0_18 = arith.constant 0 : index
      %c0_19 = arith.constant 0 : index
      %54 = vector.load %arg5[%c0_18, %c0_19] : memref<8x128xf32, #tpu.memory_space<vmem>>, vector<8x128xf32>
      %55 = vector.shape_cast %40 : vector<32x128xf32> to vector<4x8x128xf32>
      %cst_20 = arith.constant dense<0.000000e+00> : vector<8x128xf32>
      %56 = vector.multi_reduction <add>, %55, %cst_20 [0] : vector<4x8x128xf32> to vector<8x128xf32>
      %57 = arith.addf %54, %56 : vector<8x128xf32>
      %c0_21 = arith.constant 0 : index
      %c0_22 = arith.constant 0 : index
      %58 = vector.load %arg5[%c0_21, %c0_22] : memref<8x128xf32, #tpu.memory_space<vmem>>, vector<8x128xf32>
      tpu.vector_store %arg5[%c0_21, %c0_22], %57 {strides = array<i32>} : memref<8x128xf32, #tpu.memory_space<vmem>>, vector<8x128xf32>,
    } else {
    }
    %c0_i32_16 = arith.constant 0 : i32
    %51 = arith.cmpi eq, %arg1, %c0_i32_16 : i32
    %52 = arith.extui %51 : i1 to i32
    %c0_i32_17 = arith.constant 0 : i32
    %53 = arith.cmpi ne, %52, %c0_i32_17 : i32
    scf.if %53 {
      %c0_18 = arith.constant 0 : index
      %c0_19 = arith.constant 0 : index
      %54 = vector.load %arg5[%c0_18, %c0_19] : memref<8x128xf32, #tpu.memory_space<vmem>>, vector<8x128xf32>
      %cst_20 = arith.constant dense<0.000000e+00> : vector<128xf32>
      %55 = vector.multi_reduction <add>, %54, %cst_20 [0] : vector<8x128xf32> to vector<128xf32>
      %56 = vector.shape_cast %55 : vector<128xf32> to vector<1x128xf32>
      %c0_21 = arith.constant 0 : index
      %c0_22 = arith.constant 0 : index
      %57 = vector.load %arg4[%c0_21, %c0_22] : memref<1x128xf32, #tpu.memory_space<vmem>>, vector<1x128xf32>
      tpu.vector_store %arg4[%c0_21, %c0_22], %56 {strides = array<i32>} : memref<1x128xf32, #tpu.memory_space<vmem>>, vector<1x128xf32>,
    } else {
    }
    return
  }
  func.func @transform_0(%arg0: i32, %arg1: i32) -> (i32, i32) {
    %c1_i32 = arith.constant 1 : i32
    %0 = arith.muli %arg0, %c1_i32 : i32
    %1 = arith.addi %0, %arg1 : i32
    %c0_i32 = arith.constant 0 : i32
    %2 = arith.minsi %1, %c0_i32 : i32
    %c0_i32_0 = arith.constant 0 : i32
    %c0_i32_1 = arith.constant 0 : i32
    return %2, %c0_i32_0 : i32, i32
  }
  func.func @transform_1(%arg0: i32, %arg1: i32) -> (i32, i32) {
    %c1_i32 = arith.constant 1 : i32
    %0 = arith.muli %arg0, %c1_i32 : i32
    %1 = arith.addi %0, %arg1 : i32
    %c0_i32 = arith.constant 0 : i32
    %2 = arith.minsi %1, %c0_i32 : i32
    %c0_i32_0 = arith.constant 0 : i32
    %c0_i32_1 = arith.constant 0 : i32
    return %2, %c0_i32_0 : i32, i32
  }
  func.func @transform_2(%arg0: i32, %arg1: i32) -> (i32, i32) {
    %c0_i32 = arith.constant 0 : i32
    %c0_i32_0 = arith.constant 0 : i32
    return %arg0, %c0_i32 : i32, i32
  }
}

</mosaic_0001>

<llo_original>
// kernel: tpu_custom_call.1
$region0: #{tpu_custom_call.1}
  #allocation0 [shape = 'u32[]', space=smem, size = 0x4, offset = 0x4, fixed_abs, tag = 'smem constant byte address 0x4 - core index']
  #allocation1 [shape = 'u32[144,128]{1,0:T(1,128)}', space=vmem, size = 0x12000, scoped, tag = 'internal scratch']
  #allocation2 [shape = 'f32[8,128]{1,0:T(8,128)}', space=vmem, size = 0x1000, scoped, tag = 'scratch operand']
  %s0 = inlined_call_operand.hbm [shape: f32[4,128], index: 0, kind: input, shape index: {}]
  %s1 = inlined_call_operand.vmem [shape: s8[4,128], index: 1, kind: input, shape index: {}]
  %s2 = inlined_call_operand.hbm [shape: f32[1,128], index: 2, kind: output, shape index: {}]
  %s3 = sld [smem:[#allocation0]]
  $region38: #{tpu_custom_call.1} parent=0
    _
  %s5 = ssub.s32 1, %s3
  %s6 = scalar_select 0, %s5, %s3
  $region1: #{tpu_custom_call.1} parent=0
    #allocation3 [shape = 'u8[16384]{0}', space=vmem, size = 0x4000, scoped, tag = 'input window, operand 0, single buffered']
    #allocation4 [shape = 's32[1]{0}', space=sflag, size = 0x4, scoped, tag = 'scoped memory for tpu_custom_call.1']
    #allocation5 [shape = 's32[1]{0}', space=sflag, size = 0x4, scoped, tag = 'scoped memory for tpu_custom_call.1']
    #allocation6 [shape = 'u8[512]{0}', space=vmem, size = 0x400, scoped, tag = 'output window, operand 0, single buffered']
    %7 = vsyncpa [#allocation4], 0
    %8 = vsyncpa [#allocation5], 0
    // Predicated region
    $region2: #{tpu_custom_call.1} parent=1 // pred_check
      _
    $region3: #{tpu_custom_call.1} parent=1 // pred_check_branch
      %10 = sbr.rel (0) target = $region5
    $region4: #{tpu_custom_call.1} parent=1 // pred_region
      %s11 = sadd.s32 0, 0
      %p12 = scmp.lt.s32.totalorder %s11, 0
      %s13 = scalar_select %p12, %s11, 0
      %s14 = smul.u32 8, %s13
      %s15 = ssub.s32 1, %s14
      %s16 = smul.u32 64, %s15
      %s18 = ssub.s32 512, %s16
      %19 = vsyncadd [#allocation4], %s18
      %p20 = scmp.ne.s32.totalorder 0, %s16
      %s21 = smul.addr %s14, 64
      %s22 = scalar_lea.hbm %s0, %s21
      %s23 = smul.u32 4, %s15
      %s24 = sshll.u32 [#allocation3], 4
      %s25 = int_to_ptr.vmem [resolvable:$true] %s24
      %s26 = sshll.u32 %s23, 4
      %30 = dma.hbm_to_vmem [thread:$0]  (%p20), %s22, %s26, %s25, [#allocation4], 64, 64, 4
    $region5: #{tpu_custom_call.1} parent=1 // pred_fallthru
      _
    // Predicated region
    $region6: #{tpu_custom_call.1} parent=1 // pred_check
      _
    $region7: #{tpu_custom_call.1} parent=1 // pred_check_branch
      %32 = sbr.rel (0) target = $region9
    $region8: #{tpu_custom_call.1} parent=1 // pred_region
      %s33 = sadd.s32 0, 0
      %p34 = scmp.lt.s32.totalorder %s33, 0
      %s35 = scalar_select %p34, %s33, 0
      %s36 = smul.u32 8, %s35
      %s37 = ssub.s32 1, %s36
      %s38 = smul.u32 16, %s37
      %p39 = scmp.lt.s32.totalorder %s36, 0
      %s40 = scalar_select %p39, %s36, 0
      %s41 = scalar_lea.vmem %s1, %s40
      %s42 = sadd.s32 0, 0
      %p43 = scmp.lt.s32.totalorder %s42, 0
      %s44 = scalar_select %p43, %s42, 0
      %s45 = smul.u32 8, %s44
      %s46 = ssub.s32 1, %s45
      %s47 = smul.u32 16, %s46
    $region9: #{tpu_custom_call.1} parent=1 // pred_fallthru
      _
    // Predicated region
    $region10: #{tpu_custom_call.1} parent=1 // pred_check
      _
    $region11: #{tpu_custom_call.1} parent=1 // pred_check_branch
      %49 = sbr.rel (0) target = $region13
    $region12: #{tpu_custom_call.1} parent=1 // pred_region
      %50 = dma.done [#allocation4], 512
    $region13: #{tpu_custom_call.1} parent=1 // pred_fallthru
      _
    %s51 = sadd.s32 0, 0
    %p52 = scmp.lt.s32.totalorder %s51, 0
    %s53 = scalar_select %p52, %s51, 0
    %s54 = smul.u32 8, %s53
    %s55 = ssub.s32 1, %s54
    %s56 = smul.u32 16, %s55
    %p57 = scmp.lt.s32.totalorder %s54, 0
    %s58 = scalar_select %p57, %s54, 0
    %s59 = scalar_lea.vmem %s1, %s58
    %s60 = sadd.s32 0, 0
    %p61 = scmp.lt.s32.totalorder %s60, 0
    %s62 = scalar_select %p61, %s60, 0
    %s63 = smul.u32 8, %s62
    %s64 = ssub.s32 1, %s63
    %s65 = smul.u32 64, %s64
    %s66 = sadd.s32 0, 0
    %p67 = scmp.lt.s32.totalorder %s66, 0
    %s68 = scalar_select %p67, %s66, 0
    %s69 = smul.u32 8, %s68
    %s70 = ssub.s32 1, %s69
    %s71 = smul.u32 16, %s70
    %p72 = scmp.lt.s32.totalorder %s69, 0
    %s73 = scalar_select %p72, %s69, 0
    %s74 = scalar_lea.vmem %s1, %s73
    %s75 = sadd.s32 0, 0
    %p76 = scmp.lt.s32.totalorder %s75, 0
    %s77 = scalar_select %p76, %s75, 0
    %s78 = smul.u32 8, %s77
    %s79 = ssub.s32 1, %s78
    %s80 = smul.u32 16, %s79
    %p81 = scmp.eq.s32.totalorder 0, 0
    // Predicated region
    $region14: #{tpu_custom_call.1} parent=1 // pred_check
      %p82 = pneg %p81
    $region15: #{tpu_custom_call.1} parent=1 // pred_check_branch
      %84 = sbr.rel (%p82) target = $region17
    $region16: #{tpu_custom_call.1} parent=1 // pred_region
      %85 = vst [vmem:[#allocation2] sm:$0xff] 0.0
    $region17: #{tpu_custom_call.1} parent=1 // pred_fallthru
      _
    %v86 = vld [vmem:[#allocation3] sm:$0xff]
    %v87 = vld [vmem:[#allocation3 + $0x8] sm:$0xff]
    %v88 = vld [vmem:[#allocation3 + $0x10] sm:$0xff]
    %v89 = vld [vmem:[#allocation3 + $0x18] sm:$0xff]
    %v90 = vld [vmem:[%s74] sm:$0x1]
    %v91 = vld [vmem:[%s74 + $0x1] sm:$0x1]
    %v92 = vld [vmem:[%s74 + $0x2] sm:$0x1]
    %v93 = vld [vmem:[%s74 + $0x3] sm:$0x1]
    %v94 = vld [vmem:[%s74 + $0x4] sm:$0x1]
    %v95 = vld [vmem:[%s74 + $0x5] sm:$0x1]
    %v96 = vld [vmem:[%s74 + $0x6] sm:$0x1]
    %v97 = vld [vmem:[%s74 + $0x7] sm:$0x1]
    %v98 = vunpack.c.0.s8 %v90
    %v99 = vunpack.c.0.s8 %v91
    %v100 = vunpack.c.0.s8 %v92
    %v101 = vunpack.c.0.s8 %v93
    %v102 = vunpack.c.0.s8 %v94
    %v103 = vunpack.c.0.s8 %v95
    %v104 = vunpack.c.0.s8 %v96
    %v105 = vunpack.c.0.s8 %v97
    %v106 = vcvt.s32.f32 %v98
    %v107 = vcvt.s32.f32 %v99
    %v108 = vcvt.s32.f32 %v100
    %v109 = vcvt.s32.f32 %v101
    %v110 = vcvt.s32.f32 %v102
    %v111 = vcvt.s32.f32 %v103
    %v112 = vcvt.s32.f32 %v104
    %v113 = vcvt.s32.f32 %v105
    %v114 = vsub.f32 1.0, %v106
    %v115 = vsub.f32 1.0, %v107
    %v116 = vsub.f32 1.0, %v108
    %v117 = vsub.f32 1.0, %v109
    %v118 = vsub.f32 1.0, %v110
    %v119 = vsub.f32 1.0, %v111
    %v120 = vsub.f32 1.0, %v112
    %v121 = vsub.f32 1.0, %v113
    %v122 = vand.u32 2147483647, %v86
    %v123 = vand.u32 2147483647, %v87
    %v124 = vand.u32 2147483647, %v88
    %v125 = vand.u32 2147483647, %v89
    %v126 = vsub.f32 0.0, %v122
    %v127 = vsub.f32 0.0, %v123
    %v128 = vsub.f32 0.0, %v124
    %v129 = vsub.f32 0.0, %v125
    %v130 = vmul.f32 %v126, 1.442695
    %v131 = vpow.pop %v130
    %v132 = vmul.f32 %v127, 1.442695
    %v133 = vpow.pop %v132
    %v134 = vmul.f32 %v128, 1.442695
    %v135 = vpow.pop %v134
    %v136 = vmul.f32 %v129, 1.442695
    %v137 = vpow.pop %v136
    %v138 = vmax.f32 %v86, 0.0
    %v139 = vmax.f32 %v87, 0.0
    %v140 = vmax.f32 %v88, 0.0
    %v141 = vmax.f32 %v89, 0.0
    %v150 = vcombine.low %v106, %v107
    %v151 = vcombine.low %v108, %v109
    %v152 = vcombine.low %v110, %v111
    %v153 = vcombine.low %v112, %v113
    %v158 = vmul.f32 %v86, %v150
    %v159 = vmul.f32 %v87, %v151
    %v160 = vmul.f32 %v88, %v152
    %v161 = vmul.f32 %v89, %v153
    %v162 = vsub.f32 %v138, %v158
    %v163 = vsub.f32 %v139, %v159
    %v164 = vsub.f32 %v140, %v160
    %v165 = vsub.f32 %v141, %v161
    %v166 = vadd.f32 %v131, 1.0
    %v167 = vlog2.pop %v166
    %v168 = vmul.f32 %v167, 0.6931472
    %v169 = vmul.f32 -0.5, %v131
    %v170 = vadd.f32 %v169, 1.0
    %v171 = vmul.f32 %v170, %v131
    %v172 = vand.u32 2147483647, %v131
    %vm173 = vcmp.lt.f32.partialorder %v172, 0.0004427343
    %v174 = vsel %vm173, %v171, %v168
    %v175 = vadd.f32 %v133, 1.0
    %v176 = vlog2.pop %v175
    %v177 = vmul.f32 %v176, 0.6931472
    %v178 = vmul.f32 -0.5, %v133
    %v179 = vadd.f32 %v178, 1.0
    %v180 = vmul.f32 %v179, %v133
    %v181 = vand.u32 2147483647, %v133
    %vm182 = vcmp.lt.f32.partialorder %v181, 0.0004427343
    %v183 = vsel %vm182, %v180, %v177
    %v184 = vadd.f32 %v135, 1.0
    %v185 = vlog2.pop %v184
    %v186 = vmul.f32 %v185, 0.6931472
    %v187 = vmul.f32 -0.5, %v135
    %v188 = vadd.f32 %v187, 1.0
    %v189 = vmul.f32 %v188, %v135
    %v190 = vand.u32 2147483647, %v135
    %vm191 = vcmp.lt.f32.partialorder %v190, 0.0004427343
    %v192 = vsel %vm191, %v189, %v186
    %v193 = vadd.f32 %v137, 1.0
    %v194 = vlog2.pop %v193
    %v195 = vmul.f32 %v194, 0.6931472
    %v196 = vmul.f32 -0.5, %v137
    %v197 = vadd.f32 %v196, 1.0
    %v198 = vmul.f32 %v197, %v137
    %v199 = vand.u32 2147483647, %v137
    %vm200 = vcmp.lt.f32.partialorder %v199, 0.0004427343
    %v201 = vsel %vm200, %v198, %v195
    %v202 = vadd.f32 %v162, %v174
    %v203 = vadd.f32 %v163, %v183
    %v204 = vadd.f32 %v164, %v192
    %v205 = vadd.f32 %v165, %v201
    %v206 = vadd.f32 %v131, 1.0
    %v207 = vadd.f32 %v133, 1.0
    %v208 = vadd.f32 %v135, 1.0
    %v209 = vadd.f32 %v137, 1.0
    %v210 = vrcp.pop %v206
    %v211 = vmul.f32 1.0, %v210
    %v212 = vrcp.pop %v207
    %v213 = vmul.f32 1.0, %v212
    %v214 = vrcp.pop %v208
    %v215 = vmul.f32 1.0, %v214
    %v216 = vrcp.pop %v209
    %v217 = vmul.f32 1.0, %v216
    %vm218 = vcmp.ge.f32.partialorder %v86, 0.0
    %vm219 = vcmp.ge.f32.partialorder %v87, 0.0
    %vm220 = vcmp.ge.f32.partialorder %v88, 0.0
    %vm221 = vcmp.ge.f32.partialorder %v89, 0.0
    %v222 = vmul.f32 %v131, %v211
    %v223 = vmul.f32 %v133, %v213
    %v224 = vmul.f32 %v135, %v215
    %v225 = vmul.f32 %v137, %v217
    %v226 = vsel %vm218, %v211, %v222
    %v227 = vsel %vm219, %v213, %v223
    %v228 = vsel %vm220, %v215, %v224
    %v229 = vsel %vm221, %v217, %v225
    %v234 = vcombine.high %v226, %v226
    %v235 = vcombine.high %v227, %v227
    %v236 = vcombine.high %v228, %v228
    %v237 = vcombine.high %v229, %v229
    %v242 = vmul.f32 %v106, %v226
    %v243 = vmul.f32 %v107, %v234
    %v244 = vmul.f32 %v108, %v227
    %v245 = vmul.f32 %v109, %v235
    %v246 = vmul.f32 %v110, %v228
    %v247 = vmul.f32 %v111, %v236
    %v248 = vmul.f32 %v112, %v229
    %v249 = vmul.f32 %v113, %v237
    %v250 = vsub.f32 1.0, %v226
    %v251 = vsub.f32 1.0, %v227
    %v252 = vsub.f32 1.0, %v228
    %v253 = vsub.f32 1.0, %v229
    %v258 = vcombine.high %v250, %v250
    %v259 = vcombine.high %v251, %v251
    %v260 = vcombine.high %v252, %v252
    %v261 = vcombine.high %v253, %v253
    %v266 = vmul.f32 %v114, %v250
    %v267 = vmul.f32 %v115, %v258
    %v268 = vmul.f32 %v116, %v251
    %v269 = vmul.f32 %v117, %v259
    %v270 = vmul.f32 %v118, %v252
    %v271 = vmul.f32 %v119, %v260
    %v272 = vmul.f32 %v120, %v253
    %v273 = vmul.f32 %v121, %v261
    %v274 = vadd.f32 %v242, %v266
    %v275 = vadd.f32 %v243, %v267
    %v276 = vadd.f32 %v244, %v268
    %v277 = vadd.f32 %v245, %v269
    %v278 = vadd.f32 %v246, %v270
    %v279 = vadd.f32 %v247, %v271
    %v280 = vadd.f32 %v248, %v272
    %v281 = vadd.f32 %v249, %v273
    %v282 = vsub.f32 1.0, %v274
    %v283 = vsub.f32 1.0, %v275
    %v284 = vsub.f32 1.0, %v276
    %v285 = vsub.f32 1.0, %v277
    %v286 = vsub.f32 1.0, %v278
    %v287 = vsub.f32 1.0, %v279
    %v288 = vsub.f32 1.0, %v280
    %v289 = vsub.f32 1.0, %v281
    %v290 = vmul.f32 %v282, %v282
    %v291 = vmul.f32 %v283, %v283
    %v292 = vmul.f32 %v284, %v284
    %v293 = vmul.f32 %v285, %v285
    %v294 = vmul.f32 %v286, %v286
    %v295 = vmul.f32 %v287, %v287
    %v296 = vmul.f32 %v288, %v288
    %v297 = vmul.f32 %v289, %v289
    %v298 = vmul.f32 %v106, 0.25
    %v299 = vmul.f32 %v107, 0.25
    %v300 = vmul.f32 %v108, 0.25
    %v301 = vmul.f32 %v109, 0.25
    %v302 = vmul.f32 %v110, 0.25
    %v303 = vmul.f32 %v111, 0.25
    %v304 = vmul.f32 %v112, 0.25
    %v305 = vmul.f32 %v113, 0.25
    %v306 = vmul.f32 %v114, 0.75
    %v307 = vmul.f32 %v115, 0.75
    %v308 = vmul.f32 %v116, 0.75
    %v309 = vmul.f32 %v117, 0.75
    %v310 = vmul.f32 %v118, 0.75
    %v311 = vmul.f32 %v119, 0.75
    %v312 = vmul.f32 %v120, 0.75
    %v313 = vmul.f32 %v121, 0.75
    %v314 = vadd.f32 %v298, %v306
    %v315 = vadd.f32 %v299, %v307
    %v316 = vadd.f32 %v300, %v308
    %v317 = vadd.f32 %v301, %v309
    %v318 = vadd.f32 %v302, %v310
    %v319 = vadd.f32 %v303, %v311
    %v320 = vadd.f32 %v304, %v312
    %v321 = vadd.f32 %v305, %v313
    %v322 = vmul.f32 %v314, %v290
    %v323 = vmul.f32 %v315, %v291
    %v324 = vmul.f32 %v316, %v292
    %v325 = vmul.f32 %v317, %v293
    %v326 = vmul.f32 %v318, %v294
    %v327 = vmul.f32 %v319, %v295
    %v328 = vmul.f32 %v320, %v296
    %v329 = vmul.f32 %v321, %v297
    %v334 = vcombine.high %v202, %v202
    %v335 = vcombine.high %v203, %v203
    %v336 = vcombine.high %v204, %v204
    %v337 = vcombine.high %v205, %v205
    %v342 = vmul.f32 %v322, %v202
    %v343 = vmul.f32 %v323, %v334
    %v344 = vmul.f32 %v324, %v203
    %v345 = vmul.f32 %v325, %v335
    %v346 = vmul.f32 %v326, %v204
    %v347 = vmul.f32 %v327, %v336
    %v348 = vmul.f32 %v328, %v205
    %v349 = vmul.f32 %v329, %v337
    %s350 = sadd.s32 0, 0
    %s351 = smul.u32 %s350, 32
    %s352 = sadd.s32 %s351, 32
    %p353 = scmp.gt.s32.totalorder %s352, 4
    // Predicated region
    $region18: #{tpu_custom_call.1} parent=1 // pred_check
      %p354 = pneg %p353
    $region19: #{tpu_custom_call.1} parent=1 // pred_check_branch
      %356 = sbr.rel (%p354) target = $region21
    $region20: #{tpu_custom_call.1} parent=1 // pred_region
      %v357 = vlaneseq
      %v358 = vshrl.u32 %v357, 7
      %v359 = vadd.s32 %v358, 8
      %v360 = vadd.s32 %v358, 16
      %v361 = vadd.s32 %v358, 24
      %v362 = vstv %s351
      %v363 = vadd.s32 %v362, %v358
      %v364 = vadd.s32 %v362, %v359
      %v365 = vadd.s32 %v362, %v360
      %v366 = vadd.s32 %v362, %v361
      %vm367 = vcmp.lt.s32.totalorder %v363, 4
      %vm368 = vcmp.lt.s32.totalorder %v364, 4
      %vm369 = vcmp.lt.s32.totalorder %v365, 4
      %vm370 = vcmp.lt.s32.totalorder %v366, 4
      %v379 = vcombine.low %v342, %v343
      %v380 = vcombine.low %v344, %v345
      %v381 = vcombine.low %v346, %v347
      %v382 = vcombine.low %v348, %v349
      %v387 = vsel %vm367, %v379, 0.0
      %v388 = vsel %vm368, %v380, 0.0
      %v389 = vsel %vm369, %v381, 0.0
      %v390 = vsel %vm370, %v382, 0.0
      %v391 = vld [vmem:[#allocation2] sm:$0xff]
      %v392 = vadd.f32 %v387, %v388
      %v393 = vadd.f32 %v392, %v389
      %v394 = vadd.f32 %v393, %v390
      %v395 = vadd.f32 %v391, %v394
      %396 = vst [vmem:[#allocation2] sm:$0xff] %v395
    $region21: #{tpu_custom_call.1} parent=1 // pred_fallthru
      _
    %p397 = scmp.le.s32.totalorder %s352, 4
    // Predicated region
    $region22: #{tpu_custom_call.1} parent=1 // pred_check
      %p398 = pneg %p397
    $region23: #{tpu_custom_call.1} parent=1 // pred_check_branch
      %400 = sbr.rel (%p398) target = $region25
    $region24: #{tpu_custom_call.1} parent=1 // pred_region
      %v401 = vld [vmem:[#allocation2] sm:$0xff]
      %v410 = vcombine.low %v342, %v343
      %v411 = vcombine.low %v344, %v345
      %v412 = vcombine.low %v346, %v347
      %v413 = vcombine.low %v348, %v349
      %v418 = vadd.f32 %v410, %v411
      %v419 = vadd.f32 %v418, %v412
      %v420 = vadd.f32 %v419, %v413
      %v421 = vadd.f32 %v401, %v420
      %422 = vst [vmem:[#allocation2] sm:$0xff] %v421
    $region25: #{tpu_custom_call.1} parent=1 // pred_fallthru
      _
    // Predicated region
    $region26: #{tpu_custom_call.1} parent=1 // pred_check
      %p423 = pneg %p81
    $region27: #{tpu_custom_call.1} parent=1 // pred_check_branch
      %425 = sbr.rel (%p423) target = $region29
    $region28: #{tpu_custom_call.1} parent=1 // pred_region
      %v426 = vld [vmem:[#allocation2] sm:$0xff]
      %v427 = vrot.slane %v426, 4
      %v428 = vadd.f32 %v426, %v427
      %v429 = vrot.slane %v428, 2
      %v430 = vadd.f32 %v428, %v429
      %v431 = vrot.slane %v430, 1
      %v432 = vadd.f32 %v430, %v431
      %433 = vst [vmem:[#allocation6] sm:$0x1] %v432
    $region29: #{tpu_custom_call.1} parent=1 // pred_fallthru
      _
    // Predicated region
    $region30: #{tpu_custom_call.1} parent=1 // pred_check
      _
    $region31: #{tpu_custom_call.1} parent=1 // pred_check_branch
      %435 = sbr.rel (0) target = $region33
    $region32: #{tpu_custom_call.1} parent=1 // pred_region
      %s437 = ssub.s32 16, 16
      %438 = vsyncadd [#allocation5], %s437
      %s440 = sshll.u32 [#allocation6], 4
      %s441 = int_to_ptr.vmem [resolvable:$true] %s440
      %443 = dma.vmem_to_hbm [thread:$0]  %s441, 16, %s2, [#allocation5]
    $region33: #{tpu_custom_call.1} parent=1 // pred_fallthru
      _
    // Predicated region
    $region34: #{tpu_custom_call.1} parent=1 // pred_check
      _
    $region35: #{tpu_custom_call.1} parent=1 // pred_check_branch
      %445 = sbr.rel (0) target = $region37
    $region36: #{tpu_custom_call.1} parent=1 // pred_region
      %446 = dma.done [#allocation5], 16
    $region37: #{tpu_custom_call.1} parent=1 // pred_fallthru
      _
    %447 = vsyncpa [#allocation4], 1
    %448 = vsyncpa [#allocation5], 1

</llo_original>
